<compile_context>
chip_gen: v6e
topology: v6e:2x2x1
jax: 0.10.0
libtpu: 0.0.40
codegen_flags: <defaults>
</compile_context>

<pallas_src>
import jax
import jax.numpy as jnp
from jax.experimental import pallas as pl
from jax.experimental.pallas import tpu as pltpu


def _make_fcnet_kernel(n_hidden, compute_dtype):
    """Builds a kernel for: in-linear, n_hidden x tanh(linear), out-linear."""

    def kernel(*refs):
        x_ref = refs[0]
        o_ref = refs[-1]
        wb = refs[1:-1]  # alternating (w, b) refs: in, hidden..., out

        def linear(h, w_ref, b_ref):
            # bf16 (or f32) operands, f32 accumulation on the MXU.
            return (
                jnp.dot(
                    h.astype(compute_dtype),
                    w_ref[...].astype(compute_dtype),
                    preferred_element_type=jnp.float32,
                )
                + b_ref[...].astype(jnp.float32)
            )

        # Input layer (no activation, matching the PyTorch forward()).
        h = linear(x_ref[...], wb[0], wb[1])

        # Hidden layers with tanh activation (kept in f32, EUP slot).
        for li in range(n_hidden):
            h = jnp.tanh(linear(h, wb[2 + 2 * li], wb[3 + 2 * li]))

        # Output layer (no activation).
        out = linear(h, wb[-2], wb[-1])
        o_ref[...] = out.astype(o_ref.dtype)

    return kernel


def fcnet_forward(x, params, *, tm=None, use_bf16=True):
    """Runs the FC net as a single Pallas kernel, tiled over the batch axis.

    params: list of (w, b) with w shape (in, out) and b shape (1, out).
    tm:     batch tile.  Defaults to the whole batch (single grid step) when
            B <= 512, else 512-row tiles (>=2 steps for v7x's two TCs).
    """
    B, d_in = x.shape
    if tm is None:
        tm = B if B <= 512 else 512
    tm = min(tm, B)

    # Zero-pad the batch so the grid divides evenly (sliced off at the end).
    B_pad = pl.cdiv(B, tm) * tm
    x_run = x if B_pad == B else jnp.pad(x, ((0, B_pad - B), (0, 0)))

    n_hidden = len(params) - 2
    d_out = params[-1][0].shape[1]

    compute_dtype = jnp.bfloat16 if use_bf16 else jnp.float32
    kernel = _make_fcnet_kernel(n_hidden, compute_dtype)

    def rep_spec(shape):
        # Parameters are small: load the full tensor; same block every step,
        # so the pipeliner fetches them only once.
        return pl.BlockSpec(shape, lambda i: (0,) * len(shape))

    in_specs = [pl.BlockSpec((tm, d_in), lambda i: (i, 0))]
    flat_params = []
    for w, b in params:
        # Cast weights once outside the kernel (halves weight DMA bytes in the
        # bf16 path); biases stay f32 for the f32 accumulate + tanh path.
        w_arg = w.astype(compute_dtype) if use_bf16 else w
        in_specs.append(rep_spec(w.shape))
        in_specs.append(rep_spec(b.shape))
        flat_params.extend([w_arg, b])

    out = pl.pallas_call(
        kernel,
        out_shape=jax.ShapeDtypeStruct((B_pad, d_out), x.dtype),
        grid_spec=pltpu.PrefetchScalarGridSpec(
            num_scalar_prefetch=0,
            grid=(B_pad // tm,),
            in_specs=in_specs,
            out_specs=pl.BlockSpec((tm, d_out), lambda i: (i, 0)),
        ),
        compiler_params=pltpu.CompilerParams(
            dimension_semantics=("parallel",)
        ),
    )(x_run, *flat_params)

    return out if B_pad == B else out[:B]


def init_params(key, input_size, layers, output_size):
    """Deterministic PyTorch-Linear-style init: U(-1/sqrt(fan_in), +1/sqrt(fan_in)).

    Weights are stored as (in_features, out_features); biases as (1, out_features).
    """
    dims = [input_size] + list(layers) + [output_size]
    params = []
    for d_in, d_out in zip(dims[:-1], dims[1:]):
        key, kw, kb = jax.random.split(key, 3)
        bound = 1.0 / jnp.sqrt(jnp.float32(d_in))
        w = jax.random.uniform(kw, (d_in, d_out), jnp.float32, -bound, bound)
        b = jax.random.uniform(kb, (1, d_out), jnp.float32, -bound, bound)
        params.append((w, b))
    return params


def fcnet_reference(x, params):
    """Plain-JAX reference mirroring the PyTorch forward()."""
    (w_in, b_in), *hidden, (w_out, b_out) = params
    h = x @ w_in + b_in  # no activation on the input layer
    for w, b in hidden:
        h = jnp.tanh(h @ w + b)
    return h @ w_out + b_out


if __name__ == "__main__":
    # Small config consistent with Model_j_FCNet(input_size, layers, output_size).
    input_size = 16
    layers = [32, 32]       # input Linear -> 32, one hidden Linear 32 -> 32
    output_size = 4
    batch = 16

    key = jax.random.PRNGKey(0)
    key, kx = jax.random.split(key)
    x = jax.random.normal(kx, (batch, input_size), dtype=jnp.float32)

    params = init_params(key, input_size, layers, output_size)
    ref = fcnet_reference(x, params)

    # Exact f32 path: bit-for-bit semantics of the PyTorch module.
    out_f32 = jax.block_until_ready(fcnet_forward(x, params, use_bf16=False))
    assert out_f32.shape == (batch, output_size)
    assert jnp.allclose(out_f32, ref, atol=1e-5, rtol=1e-5), "f32 mismatch vs reference"

    # Fast path: bf16 MXU operands, f32 accumulation (looser tolerance).
    out_bf16 = jax.block_until_ready(fcnet_forward(x, params, use_bf16=True))
    assert out_bf16.shape == (batch, output_size)
    assert jnp.allclose(out_bf16, ref, atol=5e-2, rtol=5e-2), "bf16 mismatch vs reference"

    print("KERNEL_OK")
</pallas_src>

<mosaic_0001>
module attributes {stable_mosaic.version = 11 : i64} {
  func.func @kernel(%arg0: i32, %arg1: memref<16x16xf32, #tpu.memory_space<vmem>>, %arg2: memref<16x32xf32, #tpu.memory_space<vmem>>, %arg3: memref<1x32xf32, #tpu.memory_space<vmem>>, %arg4: memref<32x32xf32, #tpu.memory_space<vmem>>, %arg5: memref<1x32xf32, #tpu.memory_space<vmem>>, %arg6: memref<32x4xf32, #tpu.memory_space<vmem>>, %arg7: memref<1x4xf32, #tpu.memory_space<vmem>>, %arg8: memref<16x4xf32, #tpu.memory_space<vmem>>) attributes {dimension_semantics = [#tpu.dimension_semantics<parallel>], iteration_bounds = array<i64: 1>, scalar_prefetch = 0 : i64, scratch_operands = 0 : i64, tpu.core_type = #tpu.core_type<tc>, window_params = [{transform_indices = @transform_0, window_bounds = array<i64: 16, 16>}, {pipeline_mode = #tpu.pipeline_mode<synchronous>, transform_indices = @transform_1, window_bounds = array<i64: 16, 32>}, {pipeline_mode = #tpu.pipeline_mode<synchronous>, transform_indices = @transform_2, window_bounds = array<i64: 1, 32>}, {pipeline_mode = #tpu.pipeline_mode<synchronous>, transform_indices = @transform_3, window_bounds = array<i64: 32, 32>}, {pipeline_mode = #tpu.pipeline_mode<synchronous>, transform_indices = @transform_4, window_bounds = array<i64: 1, 32>}, {pipeline_mode = #tpu.pipeline_mode<synchronous>, transform_indices = @transform_5, window_bounds = array<i64: 32, 4>}, {pipeline_mode = #tpu.pipeline_mode<synchronous>, transform_indices = @transform_6, window_bounds = array<i64: 1, 4>}, {transform_indices = @transform_7, window_bounds = array<i64: 16, 4>}]} {
    %c0 = arith.constant 0 : index
    %c0_0 = arith.constant 0 : index
    %0 = vector.load %arg1[%c0, %c0_0] : memref<16x16xf32, #tpu.memory_space<vmem>>, vector<16x16xf32>
    %c0_1 = arith.constant 0 : index
    %c0_2 = arith.constant 0 : index
    %1 = vector.load %arg2[%c0_1, %c0_2] : memref<16x32xf32, #tpu.memory_space<vmem>>, vector<16x32xf32>
    %cst = arith.constant dense<0.000000e+00> : vector<16x32xf32>
    %2 = tpu.matmul %0, %1, %cst {dimension_numbers = #tpu.dot_dimension_numbers<[1], [0], [0], [1], [0, 0, 1, 1], [], []>} : vector<16x16xf32>, vector<16x32xf32>, vector<16x32xf32> -> vector<16x32xf32>
    %c0_3 = arith.constant 0 : index
    %c0_4 = arith.constant 0 : index
    %3 = vector.load %arg3[%c0_3, %c0_4] : memref<1x32xf32, #tpu.memory_space<vmem>>, vector<1x32xf32>
    %4 = vector.broadcast %3 : vector<1x32xf32> to vector<16x32xf32>
    %5 = arith.addf %2, %4 : vector<16x32xf32>
    %c0_5 = arith.constant 0 : index
    %c0_6 = arith.constant 0 : index
    %6 = vector.load %arg4[%c0_5, %c0_6] : memref<32x32xf32, #tpu.memory_space<vmem>>, vector<32x32xf32>
    %cst_7 = arith.constant dense<0.000000e+00> : vector<16x32xf32>
    %7 = tpu.matmul %5, %6, %cst_7 {dimension_numbers = #tpu.dot_dimension_numbers<[1], [0], [0], [1], [0, 0, 1, 1], [], []>} : vector<16x32xf32>, vector<32x32xf32>, vector<16x32xf32> -> vector<16x32xf32>
    %c0_8 = arith.constant 0 : index
    %c0_9 = arith.constant 0 : index
    %8 = vector.load %arg5[%c0_8, %c0_9] : memref<1x32xf32, #tpu.memory_space<vmem>>, vector<1x32xf32>
    %9 = vector.broadcast %8 : vector<1x32xf32> to vector<16x32xf32>
    %10 = arith.addf %7, %9 : vector<16x32xf32>
    %11 = math.tanh %10 : vector<16x32xf32>
    %c0_10 = arith.constant 0 : index
    %c0_11 = arith.constant 0 : index
    %12 = vector.load %arg6[%c0_10, %c0_11] : memref<32x4xf32, #tpu.memory_space<vmem>>, vector<32x4xf32>
    %cst_12 = arith.constant dense<0.000000e+00> : vector<16x4xf32>
    %13 = tpu.matmul %11, %12, %cst_12 {dimension_numbers = #tpu.dot_dimension_numbers<[1], [0], [0], [1], [0, 0, 1, 1], [], []>} : vector<16x32xf32>, vector<32x4xf32>, vector<16x4xf32> -> vector<16x4xf32>
    %c0_13 = arith.constant 0 : index
    %c0_14 = arith.constant 0 : index
    %14 = vector.load %arg7[%c0_13, %c0_14] : memref<1x4xf32, #tpu.memory_space<vmem>>, vector<1x4xf32>
    %15 = vector.broadcast %14 : vector<1x4xf32> to vector<16x4xf32>
    %16 = arith.addf %13, %15 : vector<16x4xf32>
    %c0_15 = arith.constant 0 : index
    %c0_16 = arith.constant 0 : index
    %17 = vector.load %arg8[%c0_15, %c0_16] : memref<16x4xf32, #tpu.memory_space<vmem>>, vector<16x4xf32>
    tpu.vector_store %arg8[%c0_15, %c0_16], %16 {strides = array<i32>} : memref<16x4xf32, #tpu.memory_space<vmem>>, vector<16x4xf32>,
    return
  }
  func.func @transform_0(%arg0: i32) -> (i32, i32) {
    %c0_i32 = arith.constant 0 : i32
    %c0_i32_0 = arith.constant 0 : i32
    return %arg0, %c0_i32 : i32, i32
  }
  func.func @transform_1(%arg0: i32) -> (i32, i32) {
    %c0_i32 = arith.constant 0 : i32
    %c0_i32_0 = arith.constant 0 : i32
    %c0_i32_1 = arith.constant 0 : i32
    return %c0_i32, %c0_i32_0 : i32, i32
  }
  func.func @transform_2(%arg0: i32) -> (i32, i32) {
    %c0_i32 = arith.constant 0 : i32
    %c0_i32_0 = arith.constant 0 : i32
    %c0_i32_1 = arith.constant 0 : i32
    return %c0_i32, %c0_i32_0 : i32, i32
  }
  func.func @transform_3(%arg0: i32) -> (i32, i32) {
    %c0_i32 = arith.constant 0 : i32
    %c0_i32_0 = arith.constant 0 : i32
    %c0_i32_1 = arith.constant 0 : i32
    return %c0_i32, %c0_i32_0 : i32, i32
  }
  func.func @transform_4(%arg0: i32) -> (i32, i32) {
    %c0_i32 = arith.constant 0 : i32
    %c0_i32_0 = arith.constant 0 : i32
    %c0_i32_1 = arith.constant 0 : i32
    return %c0_i32, %c0_i32_0 : i32, i32
  }
  func.func @transform_5(%arg0: i32) -> (i32, i32) {
    %c0_i32 = arith.constant 0 : i32
    %c0_i32_0 = arith.constant 0 : i32
    %c0_i32_1 = arith.constant 0 : i32
    return %c0_i32, %c0_i32_0 : i32, i32
  }
  func.func @transform_6(%arg0: i32) -> (i32, i32) {
    %c0_i32 = arith.constant 0 : i32
    %c0_i32_0 = arith.constant 0 : i32
    %c0_i32_1 = arith.constant 0 : i32
    return %c0_i32, %c0_i32_0 : i32, i32
  }
  func.func @transform_7(%arg0: i32) -> (i32, i32) {
    %c0_i32 = arith.constant 0 : i32
    %c0_i32_0 = arith.constant 0 : i32
    return %arg0, %c0_i32 : i32, i32
  }
}

</mosaic_0001>

<llo_original>
// kernel: tpu_custom_call.1
$region0: #{tpu_custom_call.1}
  #allocation0 [shape = 'u32[]', space=smem, size = 0x4, offset = 0x4, fixed_abs, tag = 'smem constant byte address 0x4 - core index']
  #allocation1 [shape = 'u32[144,128]{1,0:T(1,128)}', space=vmem, size = 0x12000, scoped, tag = 'internal scratch']
  %s0 = inlined_call_operand.hbm [shape: f32[16,16], index: 0, kind: input, shape index: {}]
  %s1 = inlined_call_operand.hbm [shape: f32[16,32], index: 1, kind: input, shape index: {}]
  %s2 = inlined_call_operand.vmem [shape: f32[1,32], index: 2, kind: input, shape index: {}]
  %s3 = inlined_call_operand.vmem [shape: f32[32,32], index: 3, kind: input, shape index: {}]
  %s4 = inlined_call_operand.vmem [shape: f32[1,32], index: 4, kind: input, shape index: {}]
  %s5 = inlined_call_operand.vmem [shape: f32[32,4], index: 5, kind: input, shape index: {}]
  %s6 = inlined_call_operand.vmem [shape: f32[1,4], index: 6, kind: input, shape index: {}]
  %s7 = inlined_call_operand.vmem [shape: f32[16,4], index: 7, kind: output, shape index: {}]
  %s8 = sld [smem:[#allocation0]]
  $region46: #{tpu_custom_call.1} parent=0
    _
  %s10 = ssub.s32 1, %s8
  %s11 = scalar_select 0, %s10, %s8
  $region1: #{tpu_custom_call.1} parent=0
    #allocation2 [shape = 'u8[8192]{0}', space=vmem, size = 0x2000, scoped, tag = 'input window, operand 0, single buffered']
    #allocation3 [shape = 's32[1]{0}', space=sflag, size = 0x4, scoped, tag = 'scoped memory for tpu_custom_call.1']
    #allocation4 [shape = 'u8[8192]{0}', space=vmem, size = 0x2000, scoped, tag = 'input window, operand 1, single buffered']
    #allocation5 [shape = 's32[1]{0}', space=sflag, size = 0x4, scoped, tag = 'scoped memory for tpu_custom_call.1']
    %12 = vsyncpa [#allocation3], 0
    %13 = vsyncpa [#allocation5], 0
    // Predicated region
    $region2: #{tpu_custom_call.1} parent=1 // pred_check
      _
    $region3: #{tpu_custom_call.1} parent=1 // pred_check_branch
      %15 = sbr.rel (0) target = $region5
    $region4: #{tpu_custom_call.1} parent=1 // pred_region
      %s17 = ssub.s32 256, 256
      %18 = vsyncadd [#allocation3], %s17
      %s19 = sshll.u32 [#allocation2], 4
      %s20 = int_to_ptr.vmem [resolvable:$true] %s19
      %25 = dma.hbm_to_vmem [thread:$0]  %s0, 256, %s20, [#allocation3], 128, 128, 8
    $region5: #{tpu_custom_call.1} parent=1 // pred_fallthru
      _
    // Predicated region
    $region6: #{tpu_custom_call.1} parent=1 // pred_check
      _
    $region7: #{tpu_custom_call.1} parent=1 // pred_check_branch
      %27 = sbr.rel (0) target = $region9
    $region8: #{tpu_custom_call.1} parent=1 // pred_region
      %s29 = ssub.s32 256, 256
      %30 = vsyncadd [#allocation5], %s29
      %s31 = sshll.u32 [#allocation4], 4
      %s32 = int_to_ptr.vmem [resolvable:$true] %s31
      %37 = dma.hbm_to_vmem [thread:$0]  %s1, 256, %s32, [#allocation5], 128, 128, 8
    $region9: #{tpu_custom_call.1} parent=1 // pred_fallthru
      _
    // Predicated region
    $region10: #{tpu_custom_call.1} parent=1 // pred_check
      _
    $region11: #{tpu_custom_call.1} parent=1 // pred_check_branch
      %39 = sbr.rel (0) target = $region13
    $region12: #{tpu_custom_call.1} parent=1 // pred_region
      _
    $region13: #{tpu_custom_call.1} parent=1 // pred_fallthru
      _
    // Predicated region
    $region14: #{tpu_custom_call.1} parent=1 // pred_check
      _
    $region15: #{tpu_custom_call.1} parent=1 // pred_check_branch
      %41 = sbr.rel (0) target = $region17
    $region16: #{tpu_custom_call.1} parent=1 // pred_region
      _
    $region17: #{tpu_custom_call.1} parent=1 // pred_fallthru
      _
    // Predicated region
    $region18: #{tpu_custom_call.1} parent=1 // pred_check
      _
    $region19: #{tpu_custom_call.1} parent=1 // pred_check_branch
      %43 = sbr.rel (0) target = $region21
    $region20: #{tpu_custom_call.1} parent=1 // pred_region
      _
    $region21: #{tpu_custom_call.1} parent=1 // pred_fallthru
      _
    // Predicated region
    $region22: #{tpu_custom_call.1} parent=1 // pred_check
      _
    $region23: #{tpu_custom_call.1} parent=1 // pred_check_branch
      %45 = sbr.rel (0) target = $region25
    $region24: #{tpu_custom_call.1} parent=1 // pred_region
      _
    $region25: #{tpu_custom_call.1} parent=1 // pred_fallthru
      _
    // Predicated region
    $region26: #{tpu_custom_call.1} parent=1 // pred_check
      _
    $region27: #{tpu_custom_call.1} parent=1 // pred_check_branch
      %47 = sbr.rel (0) target = $region29
    $region28: #{tpu_custom_call.1} parent=1 // pred_region
      _
    $region29: #{tpu_custom_call.1} parent=1 // pred_fallthru
      _
    // Predicated region
    $region30: #{tpu_custom_call.1} parent=1 // pred_check
      _
    $region31: #{tpu_custom_call.1} parent=1 // pred_check_branch
      %49 = sbr.rel (0) target = $region33
    $region32: #{tpu_custom_call.1} parent=1 // pred_region
      %50 = dma.done [#allocation3], 256
    $region33: #{tpu_custom_call.1} parent=1 // pred_fallthru
      _
    // Predicated region
    $region34: #{tpu_custom_call.1} parent=1 // pred_check
      _
    $region35: #{tpu_custom_call.1} parent=1 // pred_check_branch
      %52 = sbr.rel (0) target = $region37
    $region36: #{tpu_custom_call.1} parent=1 // pred_region
      %53 = dma.done [#allocation5], 256
    $region37: #{tpu_custom_call.1} parent=1 // pred_fallthru
      _
    %v54 = vld [vmem:[#allocation2] sm:$0xff]
    %v55 = vld [vmem:[#allocation2 + $0x8] sm:$0xff]
    %v56 = vld [vmem:[#allocation4] sm:$0xff]
    %v57 = vld [vmem:[#allocation4 + $0x8] sm:$0xff]
    %v58 = vld [vmem:[%s2] sm:$0x1]
    %v60 = vlaneseq
    %v61 = vshrl.u32 %v60, 7
    %v62 = vsub.s32 0, %v61
    %v63 = vrot.slane %v58, %v62
    %vm65 = vcmask 130048
    %v67 = vsel %vm65, %v54, 0
    %v70 = vsel %vm65, %v55, 0
    %72 = vmatprep.subr.mxu0 0.0
    %73 = vmatpush1.msra.mxu0 0.0
    %74 = vmatprep.subr.mxu0 0.0
    %75 = vmatpush1.msra.mxu0 0.0
    %76 = vmatprep.subr.mxu0 0.0
    %77 = vmatpush1.msra.mxu0 0.0
    %78 = vmatprep.subr.mxu0 0.0
    %79 = vmatpush1.msra.mxu0 0.0
    %80 = vmatprep.subr.mxu0 0.0
    %81 = vmatpush1.msra.mxu0 0.0
    %82 = vmatprep.subr.mxu0 0.0
    %83 = vmatpush1.msra.mxu0 0.0
    %84 = vmatprep.subr.mxu0 0.0
    %85 = vmatpush1.msra.mxu0 0.0
    %86 = vmatprep.subr.mxu0 0.0
    %87 = vmatpush1.msra.mxu0 0.0
    %88 = vmatprep.subr.mxu0 0.0
    %89 = vmatpush1.msra.mxu0 0.0
    %90 = vmatprep.subr.mxu0 0.0
    %91 = vmatpush1.msra.mxu0 0.0
    %92 = vmatprep.subr.mxu0 0.0
    %93 = vmatpush1.msra.mxu0 0.0
    %94 = vmatprep.subr.mxu0 0.0
    %95 = vmatpush1.msra.mxu0 0.0
    %96 = vmatprep.subr.mxu0 0.0
    %97 = vmatpush1.msra.mxu0 0.0
    %98 = vmatprep.subr.mxu0 0.0
    %99 = vmatpush1.msra.mxu0 0.0
    %100 = vmatprep.subr.mxu0 0.0
    %101 = vmatpush1.msra.mxu0 %v57
    %102 = vmatprep.subr.mxu0 0.0
    %103 = vmatpush1.msra.mxu0 %v56
    %104 = vmatprep.subr.mxu0 0.0
    %105 = vmatpush2.msra.mxu0 0.0
    %106 = vmatprep.subr.mxu0 0.0
    %107 = vmatpush2.msra.mxu0 0.0
    %108 = vmatprep.subr.mxu0 0.0
    %109 = vmatpush2.msra.mxu0 0.0
    %110 = vmatprep.subr.mxu0 0.0
    %111 = vmatpush2.msra.mxu0 0.0
    %112 = vmatprep.subr.mxu0 0.0
    %113 = vmatpush2.msra.mxu0 0.0
    %114 = vmatprep.subr.mxu0 0.0
    %115 = vmatpush2.msra.mxu0 0.0
    %116 = vmatprep.subr.mxu0 0.0
    %117 = vmatpush2.msra.mxu0 0.0
    %118 = vmatprep.subr.mxu0 0.0
    %119 = vmatpush2.msra.mxu0 0.0
    %120 = vmatprep.subr.mxu0 0.0
    %121 = vmatpush2.msra.mxu0 0.0
    %122 = vmatprep.subr.mxu0 0.0
    %123 = vmatpush2.msra.mxu0 0.0
    %124 = vmatprep.subr.mxu0 0.0
    %125 = vmatpush2.msra.mxu0 0.0
    %126 = vmatprep.subr.mxu0 0.0
    %127 = vmatpush2.msra.mxu0 0.0
    %128 = vmatprep.subr.mxu0 0.0
    %129 = vmatpush2.msra.mxu0 0.0
    %130 = vmatprep.subr.mxu0 0.0
    %131 = vmatpush2.msra.mxu0 0.0
    %132 = vmatprep.subr.mxu0 0.0
    %133 = vmatpush2.msra.mxu0 0.0
    %134 = vmatprep.subr.mxu0 0.0
    %135 = vmatpush2.msra.mxu0 0.0
    %136 = vmatprep.mubr.f32.mxu0 0.0
    %137 = vmatmul.mubr.f32.gmra.mxu0 %v67
    %v138 = vpop.f32.mrf.mxu0
    %v139 = vadd.f32 %v63, %v138
    %v140 = vpop.f32.mrf.mxu0
    %141 = vmatprep.mubr.f32.mxu0 0.0
    %142 = vmatmul.mubr.f32.gmra.mxu0 %v70
    %v143 = vpop.f32.mrf.mxu0
    %v144 = vadd.f32 %v63, %v143
    %v145 = vpop.f32.mrf.mxu0
    %146 = vdwg.mxu0
    %v147 = vld [vmem:[%s3] sm:$0xff]
    %v148 = vld [vmem:[%s3 + $0x8] sm:$0xff]
    %v149 = vld [vmem:[%s3 + $0x10] sm:$0xff]
    %v150 = vld [vmem:[%s3 + $0x18] sm:$0xff]
    %v151 = vld [vmem:[%s4] sm:$0x1]
    %v153 = vlaneseq
    %v154 = vshrl.u32 %v153, 7
    %v155 = vsub.s32 0, %v154
    %v156 = vrot.slane %v151, %v155
    %vm158 = vcmask 261120
    %v160 = vsel %vm158, %v139, 0
    %v163 = vsel %vm158, %v144, 0
    %165 = vmatprep.subr.mxu0 0.0
    %166 = vmatpush1.msra.mxu0 0.0
    %167 = vmatprep.subr.mxu0 0.0
    %168 = vmatpush1.msra.mxu0 0.0
    %169 = vmatprep.subr.mxu0 0.0
    %170 = vmatpush1.msra.mxu0 0.0
    %171 = vmatprep.subr.mxu0 0.0
    %172 = vmatpush1.msra.mxu0 0.0
    %173 = vmatprep.subr.mxu0 0.0
    %174 = vmatpush1.msra.mxu0 0.0
    %175 = vmatprep.subr.mxu0 0.0
    %176 = vmatpush1.msra.mxu0 0.0
    %177 = vmatprep.subr.mxu0 0.0
    %178 = vmatpush1.msra.mxu0 0.0
    %179 = vmatprep.subr.mxu0 0.0
    %180 = vmatpush1.msra.mxu0 0.0
    %181 = vmatprep.subr.mxu0 0.0
    %182 = vmatpush1.msra.mxu0 0.0
    %183 = vmatprep.subr.mxu0 0.0
    %184 = vmatpush1.msra.mxu0 0.0
    %185 = vmatprep.subr.mxu0 0.0
    %186 = vmatpush1.msra.mxu0 0.0
    %187 = vmatprep.subr.mxu0 0.0
    %188 = vmatpush1.msra.mxu0 0.0
    %189 = vmatprep.subr.mxu0 0.0
    %190 = vmatpush1.msra.mxu0 %v150
    %191 = vmatprep.subr.mxu0 0.0
    %192 = vmatpush1.msra.mxu0 %v149
    %193 = vmatprep.subr.mxu0 0.0
    %194 = vmatpush1.msra.mxu0 %v148
    %195 = vmatprep.subr.mxu0 0.0
    %196 = vmatpush1.msra.mxu0 %v147
    %197 = vmatprep.subr.mxu0 0.0
    %198 = vmatpush2.msra.mxu0 0.0
    %199 = vmatprep.subr.mxu0 0.0
    %200 = vmatpush2.msra.mxu0 0.0
    %201 = vmatprep.subr.mxu0 0.0
    %202 = vmatpush2.msra.mxu0 0.0
    %203 = vmatprep.subr.mxu0 0.0
    %204 = vmatpush2.msra.mxu0 0.0
    %205 = vmatprep.subr.mxu0 0.0
    %206 = vmatpush2.msra.mxu0 0.0
    %207 = vmatprep.subr.mxu0 0.0
    %208 = vmatpush2.msra.mxu0 0.0
    %209 = vmatprep.subr.mxu0 0.0
    %210 = vmatpush2.msra.mxu0 0.0
    %211 = vmatprep.subr.mxu0 0.0
    %212 = vmatpush2.msra.mxu0 0.0
    %213 = vmatprep.subr.mxu0 0.0
    %214 = vmatpush2.msra.mxu0 0.0
    %215 = vmatprep.subr.mxu0 0.0
    %216 = vmatpush2.msra.mxu0 0.0
    %217 = vmatprep.subr.mxu0 0.0
    %218 = vmatpush2.msra.mxu0 0.0
    %219 = vmatprep.subr.mxu0 0.0
    %220 = vmatpush2.msra.mxu0 0.0
    %221 = vmatprep.subr.mxu0 0.0
    %222 = vmatpush2.msra.mxu0 0.0
    %223 = vmatprep.subr.mxu0 0.0
    %224 = vmatpush2.msra.mxu0 0.0
    %225 = vmatprep.subr.mxu0 0.0
    %226 = vmatpush2.msra.mxu0 0.0
    %227 = vmatprep.subr.mxu0 0.0
    %228 = vmatpush2.msra.mxu0 0.0
    %229 = vmatprep.mubr.f32.mxu0 0.0
    %230 = vmatmul.mubr.f32.gmra.mxu0 %v160
    %v231 = vpop.f32.mrf.mxu0
    %v232 = vadd.f32 %v156, %v231
    %v233 = vpop.f32.mrf.mxu0
    %234 = vmatprep.mubr.f32.mxu0 0.0
    %235 = vmatmul.mubr.f32.gmra.mxu0 %v163
    %v236 = vpop.f32.mrf.mxu0
    %v237 = vadd.f32 %v156, %v236
    %v238 = vpop.f32.mrf.mxu0
    %239 = vdwg.mxu0
    %v240 = vtanh.pop %v232
    %v241 = vtanh.pop %v237
    %v242 = vld [vmem:[%s5] sm:$0xff]
    %v243 = vld [vmem:[%s5 + $0x8] sm:$0xff]
    %v244 = vld [vmem:[%s5 + $0x10] sm:$0xff]
    %v245 = vld [vmem:[%s5 + $0x18] sm:$0xff]
    %v246 = vld [vmem:[%s6] sm:$0x1]
    %v248 = vlaneseq
    %v249 = vshrl.u32 %v248, 7
    %v250 = vsub.s32 0, %v249
    %v251 = vrot.slane %v246, %v250
    %v254 = vsel %vm158, %v240, 0
    %v257 = vsel %vm158, %v241, 0
    %259 = vmatprep.subr.mxu0 0.0
    %260 = vmatpush1.msra.mxu0 0.0
    %261 = vmatprep.subr.mxu0 0.0
    %262 = vmatpush1.msra.mxu0 0.0
    %263 = vmatprep.subr.mxu0 0.0
    %264 = vmatpush1.msra.mxu0 0.0
    %265 = vmatprep.subr.mxu0 0.0
    %266 = vmatpush1.msra.mxu0 0.0
    %267 = vmatprep.subr.mxu0 0.0
    %268 = vmatpush1.msra.mxu0 0.0
    %269 = vmatprep.subr.mxu0 0.0
    %270 = vmatpush1.msra.mxu0 0.0
    %271 = vmatprep.subr.mxu0 0.0
    %272 = vmatpush1.msra.mxu0 0.0
    %273 = vmatprep.subr.mxu0 0.0
    %274 = vmatpush1.msra.mxu0 0.0
    %275 = vmatprep.subr.mxu0 0.0
    %276 = vmatpush1.msra.mxu0 0.0
    %277 = vmatprep.subr.mxu0 0.0
    %278 = vmatpush1.msra.mxu0 0.0
    %279 = vmatprep.subr.mxu0 0.0
    %280 = vmatpush1.msra.mxu0 0.0
    %281 = vmatprep.subr.mxu0 0.0
    %282 = vmatpush1.msra.mxu0 0.0
    %283 = vmatprep.subr.mxu0 0.0
    %284 = vmatpush1.msra.mxu0 %v245
    %285 = vmatprep.subr.mxu0 0.0
    %286 = vmatpush1.msra.mxu0 %v244
    %287 = vmatprep.subr.mxu0 0.0
    %288 = vmatpush1.msra.mxu0 %v243
    %289 = vmatprep.subr.mxu0 0.0
    %290 = vmatpush1.msra.mxu0 %v242
    %291 = vmatprep.subr.mxu0 0.0
    %292 = vmatpush2.msra.mxu0 0.0
    %293 = vmatprep.subr.mxu0 0.0
    %294 = vmatpush2.msra.mxu0 0.0
    %295 = vmatprep.subr.mxu0 0.0
    %296 = vmatpush2.msra.mxu0 0.0
    %297 = vmatprep.subr.mxu0 0.0
    %298 = vmatpush2.msra.mxu0 0.0
    %299 = vmatprep.subr.mxu0 0.0
    %300 = vmatpush2.msra.mxu0 0.0
    %301 = vmatprep.subr.mxu0 0.0
    %302 = vmatpush2.msra.mxu0 0.0
    %303 = vmatprep.subr.mxu0 0.0
    %304 = vmatpush2.msra.mxu0 0.0
    %305 = vmatprep.subr.mxu0 0.0
    %306 = vmatpush2.msra.mxu0 0.0
    %307 = vmatprep.subr.mxu0 0.0
    %308 = vmatpush2.msra.mxu0 0.0
    %309 = vmatprep.subr.mxu0 0.0
    %310 = vmatpush2.msra.mxu0 0.0
    %311 = vmatprep.subr.mxu0 0.0
    %312 = vmatpush2.msra.mxu0 0.0
    %313 = vmatprep.subr.mxu0 0.0
    %314 = vmatpush2.msra.mxu0 0.0
    %315 = vmatprep.subr.mxu0 0.0
    %316 = vmatpush2.msra.mxu0 0.0
    %317 = vmatprep.subr.mxu0 0.0
    %318 = vmatpush2.msra.mxu0 0.0
    %319 = vmatprep.subr.mxu0 0.0
    %320 = vmatpush2.msra.mxu0 0.0
    %321 = vmatprep.subr.mxu0 0.0
    %322 = vmatpush2.msra.mxu0 0.0
    %323 = vmatprep.mubr.f32.mxu0 0.0
    %324 = vmatmul.mubr.f32.gmra.mxu0 %v254
    %v325 = vpop.f32.mrf.mxu0
    %v326 = vadd.f32 %v251, %v325
    %v327 = vpop.f32.mrf.mxu0
    %328 = vmatprep.mubr.f32.mxu0 0.0
    %329 = vmatmul.mubr.f32.gmra.mxu0 %v257
    %v330 = vpop.f32.mrf.mxu0
    %v331 = vadd.f32 %v251, %v330
    %v332 = vpop.f32.mrf.mxu0
    %333 = vdwg.mxu0
    %vm334 = vcmask 31744
    %335 = vst.msk [vmem:[%s7] sm:$0xff] %vm334, %v326
    %336 = vst.msk [vmem:[%s7 + $0x8] sm:$0xff] %vm334, %v331
    // Predicated region
    $region38: #{tpu_custom_call.1} parent=1 // pred_check
      _
    $region39: #{tpu_custom_call.1} parent=1 // pred_check_branch
      %338 = sbr.rel (0) target = $region41
    $region40: #{tpu_custom_call.1} parent=1 // pred_region
      _
    $region41: #{tpu_custom_call.1} parent=1 // pred_fallthru
      _
    // Predicated region
    $region42: #{tpu_custom_call.1} parent=1 // pred_check
      _
    $region43: #{tpu_custom_call.1} parent=1 // pred_check_branch
      %340 = sbr.rel (0) target = $region45
    $region44: #{tpu_custom_call.1} parent=1 // pred_region
      _
    $region45: #{tpu_custom_call.1} parent=1 // pred_fallthru
      _
    %341 = vsyncpa [#allocation3], 1
    %342 = vsyncpa [#allocation5], 1

</llo_original>
